<compile_context>
chip_gen: v7x
topology: tpu7x:2x2x1
jax: 0.10.0
libtpu: 0.0.40
codegen_flags: <defaults>
</compile_context>

<pallas_src>
import math
import jax
import jax.numpy as jnp
from jax.experimental import pallas as pl
from jax.experimental.pallas import tpu as pltpu


def _round_up(x: int, m: int) -> int:
    return ((x + m - 1) // m) * m


def _linear_bias_kernel(x_ref, wt_ref, b_ref, o_ref):
    # x_ref:[TM,Cin] wt_ref:[Cin,Cout] b_ref:[1,Cout] o_ref:[TM,Cout]
    acc = jnp.dot(x_ref[...], wt_ref[...], preferred_element_type=jnp.float32)
    o_ref[...] = (acc + b_ref[...].astype(jnp.float32)).astype(o_ref.dtype)


def _linear_nobias_kernel(x_ref, wt_ref, o_ref):
    acc = jnp.dot(x_ref[...], wt_ref[...], preferred_element_type=jnp.float32)
    o_ref[...] = acc.astype(o_ref.dtype)


def graph_linear(x, weight_t, bias2d=None, *, tm=512, compute_dtype=None):
    """y = x @ weight_t + bias   (exact nn.Linear semantics, weight_t = W.T).

    x        : [N, Cin]
    weight_t : [Cin, Cout]   (pre-transposed weight)
    bias2d   : [1, Cout] or None
    tm       : node-dim tile size (rows per grid step)
    compute_dtype : optional lower-precision dtype (e.g. jnp.bfloat16) for the
                    matmul inputs; accumulation stays f32.
    """
    n, cin = x.shape
    cin_w, cout = weight_t.shape
    assert cin_w == cin, "weight_t must be [Cin, Cout]"
    out_dtype = x.dtype

    # Lane-dense channel padding (128 multiples; 256 for Cout in (128, 256]).
    cin_p = max(_round_up(cin, 128), 128)
    cout_p = 256 if 128 < cout <= 256 else max(_round_up(cout, 128), 128)

    # Node-dim tile: multiple of 8 sublanes; pad N so the grid divides exactly.
    tm_eff = min(tm, _round_up(n, 8))
    n_p = _round_up(n, tm_eff)

    cdtype = compute_dtype if compute_dtype is not None else x.dtype
    x_p = jnp.zeros((n_p, cin_p), cdtype).at[:n, :cin].set(x.astype(cdtype))
    wt_p = jnp.zeros((cin_p, cout_p), cdtype).at[:cin, :cout].set(
        weight_t.astype(cdtype))

    grid = (n_p // tm_eff,)
    in_specs = [
        pl.BlockSpec((tm_eff, cin_p), lambda i: (i, 0)),   # streamed x tile
        pl.BlockSpec((cin_p, cout_p), lambda i: (0, 0)),   # W^T resident
    ]
    operands = [x_p, wt_p]

    if bias2d is not None:
        b_p = jnp.zeros((1, cout_p), jnp.float32).at[:, :cout].set(
            bias2d.astype(jnp.float32))
        in_specs.append(pl.BlockSpec((1, cout_p), lambda i: (0, 0)))  # resident
        operands.append(b_p)
        kernel = _linear_bias_kernel
    else:
        kernel = _linear_nobias_kernel

    in_bytes = jnp.dtype(cdtype).itemsize
    out_bytes = jnp.dtype(out_dtype).itemsize
    cost = pl.CostEstimate(
        flops=2 * n_p * cin_p * cout_p,
        transcendentals=0,
        bytes_accessed=in_bytes * (n_p * cin_p + cin_p * cout_p)
        + out_bytes * n_p * cout_p,
    )

    out = pl.pallas_call(
        kernel,
        out_shape=jax.ShapeDtypeStruct((n_p, cout_p), out_dtype),
        grid=grid,
        in_specs=in_specs,
        out_specs=pl.BlockSpec((tm_eff, cout_p), lambda i: (i, 0)),
        compiler_params=pltpu.CompilerParams(
            dimension_semantics=("parallel",),   # N axis is independent (megacore)
            vmem_limit_bytes=64 << 20,
        ),
        cost_estimate=cost,
    )(*operands)

    # Slice off node / channel padding.
    return out[:n, :cout]


class GraphLinearPallas:
    """Mirrors GraphLinear: applies a Linear to the `.x` field of a graph batch."""

    def __init__(self, in_channels: int, out_channels: int, bias: bool = True,
                 *, key, compute_dtype=None):
        self.in_channels = in_channels
        self.out_channels = out_channels
        self.compute_dtype = compute_dtype
        kw, kb = jax.random.split(key)
        # Deterministic init mimicking torch.nn.Linear defaults.
        bound = 1.0 / math.sqrt(in_channels)
        self.weight = jax.random.uniform(
            kw, (out_channels, in_channels), jnp.float32, -bound, bound)
        # Pre-transpose once (MXU-friendly [Cin, Cout] RHS; no per-call transpose).
        self.weight_t = jnp.asarray(self.weight.T)
        if bias:
            self.bias = jax.random.uniform(
                kb, (out_channels,), jnp.float32, -bound, bound)
            self.bias2d = self.bias.reshape(1, out_channels)
        else:
            self.bias = None
            self.bias2d = None

    def __call__(self, batch: dict):
        # `batch` stands in for the PyG Data/Batch object: dict with key "x".
        batch = dict(batch)
        batch["x"] = graph_linear(
            batch["x"], self.weight_t, self.bias2d,
            compute_dtype=self.compute_dtype)
        return batch


if __name__ == "__main__":
    key = jax.random.PRNGKey(0)
    k_x, k_mod = jax.random.split(key)

    num_nodes, in_channels, out_channels = 16, 8, 32
    x = jax.random.normal(k_x, (num_nodes, in_channels), jnp.float32)
    # Minimal stand-in for a PyG Batch: node features + (unused) edge_index.
    batch = {
        "x": x,
        "edge_index": jnp.zeros((2, 4), jnp.int32),
    }

    module = GraphLinearPallas(in_channels, out_channels, bias=True, key=k_mod)
    out_batch = module(batch)
    y = jax.block_until_ready(out_batch["x"])

    # Reference check against plain JAX (same semantics as torch.nn.Linear).
    y_ref = x @ module.weight.T + module.bias
    assert y.shape == (num_nodes, out_channels)
    assert jnp.allclose(y, y_ref, atol=1e-5, rtol=1e-5)

    # Also exercise the bias-free path.
    module_nb = GraphLinearPallas(in_channels, out_channels, bias=False, key=k_mod)
    y_nb = jax.block_until_ready(module_nb(batch)["x"])
    assert jnp.allclose(y_nb, x @ module_nb.weight.T, atol=1e-5, rtol=1e-5)

    print("KERNEL_OK")
</pallas_src>

<mosaic_0001>
module attributes {stable_mosaic.version = 11 : i64} {
  func.func @_linear_bias_kernel(%arg0: i32, %arg1: memref<16x128xf32, #tpu.memory_space<vmem>>, %arg2: memref<128x128xf32, #tpu.memory_space<vmem>>, %arg3: memref<1x128xf32, #tpu.memory_space<vmem>>, %arg4: memref<16x128xf32, #tpu.memory_space<vmem>>) attributes {dimension_semantics = [#tpu.dimension_semantics<parallel>], iteration_bounds = array<i64: 1>, scalar_prefetch = 0 : i64, scratch_operands = 0 : i64, tpu.core_type = #tpu.core_type<tc>, window_params = [{transform_indices = @transform_0, window_bounds = array<i64: 16, 128>}, {pipeline_mode = #tpu.pipeline_mode<synchronous>, transform_indices = @transform_1, window_bounds = array<i64: 128, 128>}, {pipeline_mode = #tpu.pipeline_mode<synchronous>, transform_indices = @transform_2, window_bounds = array<i64: 1, 128>}, {transform_indices = @transform_3, window_bounds = array<i64: 16, 128>}]} {
    %c0 = arith.constant 0 : index
    %c0_0 = arith.constant 0 : index
    %0 = vector.load %arg1[%c0, %c0_0] : memref<16x128xf32, #tpu.memory_space<vmem>>, vector<16x128xf32>
    %c0_1 = arith.constant 0 : index
    %c0_2 = arith.constant 0 : index
    %1 = vector.load %arg2[%c0_1, %c0_2] : memref<128x128xf32, #tpu.memory_space<vmem>>, vector<128x128xf32>
    %cst = arith.constant dense<0.000000e+00> : vector<16x128xf32>
    %2 = tpu.matmul %0, %1, %cst {dimension_numbers = #tpu.dot_dimension_numbers<[1], [0], [0], [1], [0, 0, 1, 1], [], []>} : vector<16x128xf32>, vector<128x128xf32>, vector<16x128xf32> -> vector<16x128xf32>
    %c0_3 = arith.constant 0 : index
    %c0_4 = arith.constant 0 : index
    %3 = vector.load %arg3[%c0_3, %c0_4] : memref<1x128xf32, #tpu.memory_space<vmem>>, vector<1x128xf32>
    %4 = vector.broadcast %3 : vector<1x128xf32> to vector<16x128xf32>
    %5 = arith.addf %2, %4 : vector<16x128xf32>
    %c0_5 = arith.constant 0 : index
    %c0_6 = arith.constant 0 : index
    %6 = vector.load %arg4[%c0_5, %c0_6] : memref<16x128xf32, #tpu.memory_space<vmem>>, vector<16x128xf32>
    tpu.vector_store %arg4[%c0_5, %c0_6], %5 {strides = array<i32>} : memref<16x128xf32, #tpu.memory_space<vmem>>, vector<16x128xf32>,
    return
  }
  func.func @transform_0(%arg0: i32) -> (i32, i32) {
    %c0_i32 = arith.constant 0 : i32
    %c0_i32_0 = arith.constant 0 : i32
    return %arg0, %c0_i32 : i32, i32
  }
  func.func @transform_1(%arg0: i32) -> (i32, i32) {
    %c0_i32 = arith.constant 0 : i32
    %c0_i32_0 = arith.constant 0 : i32
    %c0_i32_1 = arith.constant 0 : i32
    return %c0_i32, %c0_i32_0 : i32, i32
  }
  func.func @transform_2(%arg0: i32) -> (i32, i32) {
    %c0_i32 = arith.constant 0 : i32
    %c0_i32_0 = arith.constant 0 : i32
    %c0_i32_1 = arith.constant 0 : i32
    return %c0_i32, %c0_i32_0 : i32, i32
  }
  func.func @transform_3(%arg0: i32) -> (i32, i32) {
    %c0_i32 = arith.constant 0 : i32
    %c0_i32_0 = arith.constant 0 : i32
    return %arg0, %c0_i32 : i32, i32
  }
}

</mosaic_0001>

<llo_original>
// kernel: tpu_custom_call.1
$region0: #{tpu_custom_call.1}
  #allocation0 [shape = 'u32[]', space=smem, size = 0x4, offset = 0x4, fixed_abs, tag = 'smem constant byte address 0x4 - core index']
  #allocation1 [shape = 'u32[144,128]{1,0:T(1,128)}', space=vmem, size = 0x12000, scoped, tag = 'internal scratch']
  %s0 = inlined_call_operand.hbm [shape: f32[16,128], index: 0, kind: input, shape index: {}]
  %s1 = inlined_call_operand.hbm [shape: f32[128,128], index: 1, kind: input, shape index: {}]
  %s2 = inlined_call_operand.hbm [shape: f32[1,128], index: 2, kind: input, shape index: {}]
  %s3 = inlined_call_operand.hbm [shape: f32[16,128], index: 3, kind: output, shape index: {}]
  %s4 = sld [smem:[#allocation0]]
  $region34: #{tpu_custom_call.1} parent=0
    _
  %s6 = ssub.s32 1, %s4
  %s7 = scalar_select 0, %s6, %s4
  $region1: #{tpu_custom_call.1} parent=0
    #allocation2 [shape = 'u8[8192]{0}', space=vmem, size = 0x2000, scoped, tag = 'input window, operand 0, single buffered']
    #allocation3 [shape = 's32[1]{0}', space=sflag, size = 0x4, scoped, tag = 'scoped memory for tpu_custom_call.1']
    #allocation4 [shape = 's32[1]{0}', space=sflag, size = 0x4, scoped, tag = 'scoped memory for tpu_custom_call.1']
    #allocation5 [shape = 'u8[65536]{0}', space=vmem, size = 0x10000, scoped, tag = 'input window, operand 1, single buffered']
    #allocation6 [shape = 's32[1]{0}', space=sflag, size = 0x4, scoped, tag = 'scoped memory for tpu_custom_call.1']
    #allocation7 [shape = 'u8[512]{0}', space=vmem, size = 0x400, scoped, tag = 'input window, operand 2, single buffered']
    #allocation8 [shape = 'u8[8192]{0}', space=vmem, size = 0x2000, scoped, tag = 'output window, operand 0, single buffered']
    %8 = vsyncpa [#allocation3], 0
    %9 = vsyncpa [#allocation6], 0
    %10 = vsyncpa [#allocation4], 0
    // Predicated region
    $region2: #{tpu_custom_call.1} parent=1 // pred_check
      _
    $region3: #{tpu_custom_call.1} parent=1 // pred_check_branch
      %12 = sbr.rel (0) target = $region5
    $region4: #{tpu_custom_call.1} parent=1 // pred_region
      %s14 = ssub.s32 256, 256
      %15 = vsyncadd [#allocation3], %s14
      %s16 = sshll.u32 [#allocation2], 4
      %s17 = int_to_ptr.vmem [resolvable:$true] %s16
      %22 = dma.hbm_to_vmem [thread:$0]  %s0, 256, %s17, [#allocation3], 128, 128, 8
    $region5: #{tpu_custom_call.1} parent=1 // pred_fallthru
      _
    // Predicated region
    $region6: #{tpu_custom_call.1} parent=1 // pred_check
      _
    $region7: #{tpu_custom_call.1} parent=1 // pred_check_branch
      %24 = sbr.rel (0) target = $region9
    $region8: #{tpu_custom_call.1} parent=1 // pred_region
      %s26 = ssub.s32 2048, 2048
      %27 = vsyncadd [#allocation6], %s26
      %s28 = sshll.u32 [#allocation5], 4
      %s29 = int_to_ptr.vmem [resolvable:$true] %s28
      %34 = dma.hbm_to_vmem [thread:$0]  %s1, 2048, %s29, [#allocation6], 128, 128, 8
    $region9: #{tpu_custom_call.1} parent=1 // pred_fallthru
      _
    // Predicated region
    $region10: #{tpu_custom_call.1} parent=1 // pred_check
      _
    $region11: #{tpu_custom_call.1} parent=1 // pred_check_branch
      %36 = sbr.rel (0) target = $region13
    $region12: #{tpu_custom_call.1} parent=1 // pred_region
      %s38 = ssub.s32 16, 16
      %39 = vsyncadd [#allocation6], %s38
      %s41 = sshll.u32 [#allocation7], 4
      %s42 = int_to_ptr.vmem [resolvable:$true] %s41
      %44 = dma.hbm_to_vmem [thread:$0]  %s2, 16, %s42, [#allocation6]
    $region13: #{tpu_custom_call.1} parent=1 // pred_fallthru
      _
    // Predicated region
    $region14: #{tpu_custom_call.1} parent=1 // pred_check
      _
    $region15: #{tpu_custom_call.1} parent=1 // pred_check_branch
      %46 = sbr.rel (0) target = $region17
    $region16: #{tpu_custom_call.1} parent=1 // pred_region
      %47 = dma.done [#allocation3], 256
    $region17: #{tpu_custom_call.1} parent=1 // pred_fallthru
      _
    // Predicated region
    $region18: #{tpu_custom_call.1} parent=1 // pred_check
      _
    $region19: #{tpu_custom_call.1} parent=1 // pred_check_branch
      %49 = sbr.rel (0) target = $region21
    $region20: #{tpu_custom_call.1} parent=1 // pred_region
      %50 = dma.done [#allocation6], 2048
    $region21: #{tpu_custom_call.1} parent=1 // pred_fallthru
      _
    // Predicated region
    $region22: #{tpu_custom_call.1} parent=1 // pred_check
      _
    $region23: #{tpu_custom_call.1} parent=1 // pred_check_branch
      %52 = sbr.rel (0) target = $region25
    $region24: #{tpu_custom_call.1} parent=1 // pred_region
      %53 = dma.done [#allocation6], 16
    $region25: #{tpu_custom_call.1} parent=1 // pred_fallthru
      _
    %v54 = vld [vmem:[#allocation2] sm:$0xff]
    %v55 = vld [vmem:[#allocation2 + $0x8] sm:$0xff]
    %v56 = vld [vmem:[#allocation5] sm:$0xff]
    %v57 = vld [vmem:[#allocation5 + $0x8] sm:$0xff]
    %v58 = vld [vmem:[#allocation5 + $0x10] sm:$0xff]
    %v59 = vld [vmem:[#allocation5 + $0x18] sm:$0xff]
    %v60 = vld [vmem:[#allocation5 + $0x20] sm:$0xff]
    %v61 = vld [vmem:[#allocation5 + $0x28] sm:$0xff]
    %v62 = vld [vmem:[#allocation5 + $0x30] sm:$0xff]
    %v63 = vld [vmem:[#allocation5 + $0x38] sm:$0xff]
    %v64 = vld [vmem:[#allocation5 + $0x40] sm:$0xff]
    %v65 = vld [vmem:[#allocation5 + $0x48] sm:$0xff]
    %v66 = vld [vmem:[#allocation5 + $0x50] sm:$0xff]
    %v67 = vld [vmem:[#allocation5 + $0x58] sm:$0xff]
    %v68 = vld [vmem:[#allocation5 + $0x60] sm:$0xff]
    %v69 = vld [vmem:[#allocation5 + $0x68] sm:$0xff]
    %v70 = vld [vmem:[#allocation5 + $0x70] sm:$0xff]
    %v71 = vld [vmem:[#allocation5 + $0x78] sm:$0xff]
    %v72 = vld [vmem:[#allocation7] sm:$0x1]
    %v74 = vlaneseq
    %v75 = vshrl.u32 %v74, 7
    %v76 = vsub.s32 0, %v75
    %v77 = vrot.slane %v72, %v76
    %79 = vmatprep.subr.mxu0 0.0
    %80 = vmatpush1.msra.mxu0 %v56
    %81 = vmatprep.subr.mxu0 0.0
    %82 = vmatpush1.msra.mxu0 %v57
    %83 = vmatprep.subr.mxu0 0.0
    %84 = vmatpush1.msra.mxu0 %v58
    %85 = vmatprep.subr.mxu0 0.0
    %86 = vmatpush1.msra.mxu0 %v59
    %87 = vmatprep.subr.mxu0 0.0
    %88 = vmatpush1.msra.mxu0 %v60
    %89 = vmatprep.subr.mxu0 0.0
    %90 = vmatpush1.msra.mxu0 %v61
    %91 = vmatprep.subr.mxu0 0.0
    %92 = vmatpush1.msra.mxu0 %v62
    %93 = vmatprep.subr.mxu0 0.0
    %94 = vmatpush1.msra.mxu0 %v63
    %95 = vmatprep.subr.mxu0 0.0
    %96 = vmatpush1.msra.mxu0 %v64
    %97 = vmatprep.subr.mxu0 0.0
    %98 = vmatpush1.msra.mxu0 %v65
    %99 = vmatprep.subr.mxu0 0.0
    %100 = vmatpush1.msra.mxu0 %v66
    %101 = vmatprep.subr.mxu0 0.0
    %102 = vmatpush1.msra.mxu0 %v67
    %103 = vmatprep.subr.mxu0 0.0
    %104 = vmatpush1.msra.mxu0 %v68
    %105 = vmatprep.subr.mxu0 0.0
    %106 = vmatpush1.msra.mxu0 %v69
    %107 = vmatprep.subr.mxu0 0.0
    %108 = vmatpush1.msra.mxu0 %v70
    %109 = vmatprep.subr.mxu0 0.0
    %110 = vmatpush1.msra.mxu0 %v71
    %111 = vmatprep.subr.mxu0 0.0
    %112 = vmatpush1.msra.mxu0 0.0
    %113 = vmatprep.subr.mxu0 0.0
    %114 = vmatpush1.msra.mxu0 0.0
    %115 = vmatprep.subr.mxu0 0.0
    %116 = vmatpush1.msra.mxu0 0.0
    %117 = vmatprep.subr.mxu0 0.0
    %118 = vmatpush1.msra.mxu0 0.0
    %119 = vmatprep.subr.mxu0 0.0
    %120 = vmatpush1.msra.mxu0 0.0
    %121 = vmatprep.subr.mxu0 0.0
    %122 = vmatpush1.msra.mxu0 0.0
    %123 = vmatprep.subr.mxu0 0.0
    %124 = vmatpush1.msra.mxu0 0.0
    %125 = vmatprep.subr.mxu0 0.0
    %126 = vmatpush1.msra.mxu0 0.0
    %127 = vmatprep.subr.mxu0 0.0
    %128 = vmatpush1.msra.mxu0 0.0
    %129 = vmatprep.subr.mxu0 0.0
    %130 = vmatpush1.msra.mxu0 0.0
    %131 = vmatprep.subr.mxu0 0.0
    %132 = vmatpush1.msra.mxu0 0.0
    %133 = vmatprep.subr.mxu0 0.0
    %134 = vmatpush1.msra.mxu0 0.0
    %135 = vmatprep.subr.mxu0 0.0
    %136 = vmatpush1.msra.mxu0 0.0
    %137 = vmatprep.subr.mxu0 0.0
    %138 = vmatpush1.msra.mxu0 0.0
    %139 = vmatprep.subr.mxu0 0.0
    %140 = vmatpush1.msra.mxu0 0.0
    %141 = vmatprep.subr.mxu0 0.0
    %142 = vmatpush1.msra.mxu0 0.0
    %143 = vmatprep.mubr.f32.mxu0 0.0
    %144 = vmatmul.mubr.f32.gmra.mrb[0].mxu0 %v54
    %v145 = vpop.f32.mrb[0].mxu0
    %v146 = vadd.f32 %v77, %v145
    %v147 = vpop.f32.mrb[0].mxu0
    %148 = vmatprep.mubr.f32.mxu0 0.0
    %149 = vmatmul.mubr.f32.gmra.mrb[0].mxu0 %v55
    %v150 = vpop.f32.mrb[0].mxu0
    %v151 = vadd.f32 %v77, %v150
    %v152 = vpop.f32.mrb[0].mxu0
    %153 = vdwg.mxu0
    %154 = vst [vmem:[#allocation8] sm:$0xff] %v146
    %155 = vst [vmem:[#allocation8 + $0x8] sm:$0xff] %v151
    // Predicated region
    $region26: #{tpu_custom_call.1} parent=1 // pred_check
      _
    $region27: #{tpu_custom_call.1} parent=1 // pred_check_branch
      %157 = sbr.rel (0) target = $region29
    $region28: #{tpu_custom_call.1} parent=1 // pred_region
      %s159 = ssub.s32 256, 256
      %160 = vsyncadd [#allocation4], %s159
      %s161 = sshll.u32 [#allocation8], 4
      %s162 = int_to_ptr.vmem [resolvable:$true] %s161
      %167 = dma.vmem_to_hbm [thread:$0]  %s162, 256, %s3, [#allocation4], 128, 128, 8
    $region29: #{tpu_custom_call.1} parent=1 // pred_fallthru
      _
    // Predicated region
    $region30: #{tpu_custom_call.1} parent=1 // pred_check
      _
    $region31: #{tpu_custom_call.1} parent=1 // pred_check_branch
      %169 = sbr.rel (0) target = $region33
    $region32: #{tpu_custom_call.1} parent=1 // pred_region
      %170 = dma.done [#allocation4], 256
    $region33: #{tpu_custom_call.1} parent=1 // pred_fallthru
      _
    %171 = vsyncpa [#allocation3], 1
    %172 = vsyncpa [#allocation6], 1
    %173 = vsyncpa [#allocation4], 1

</llo_original>
